<compile_context>
chip_gen: v5e
topology: v5e:2x2
jax: 0.10.0
libtpu: 0.0.40
codegen_flags: <defaults>
</compile_context>

<pallas_src>
import functools

import jax
import jax.numpy as jnp
from jax.experimental import pallas as pl
from jax.experimental.pallas import tpu as pltpu


def _shuffle_kernel(x_ref, o_ref, *, groups):
    # x_ref: (1, g, cb, hw)   o_ref: (1, cb, g*hw)
    # Output channel k picks lanes [gi*hw : (gi+1)*hw) from input (group gi,
    # sub-channel k) -> a lane-axis concatenation of the g group slabs.
    parts = [x_ref[0, gi] for gi in range(groups)]  # each (cb, hw)
    o_ref[0] = jnp.concatenate(parts, axis=-1)


def _pick_channel_block(cpg, row_bytes, sub, target_bytes=4 << 20):
    """Largest sublane-aligned divisor of cpg whose block stays <= target_bytes.

    row_bytes = bytes moved per sub-channel per step (covers all g groups).
    Returns cpg itself (full extent, always layout-legal) when it fits or when
    no aligned divisor exists.
    """
    if cpg * row_bytes <= target_bytes:
        return cpg
    cands = [
        d for d in range(sub, cpg, sub)
        if cpg % d == 0 and d * row_bytes <= target_bytes
    ]
    return max(cands) if cands else cpg


def _ensure_min_steps(cpg, cb, row_bytes, n_batch, sub,
                      min_steps=4, min_block_bytes=128 << 10):
    """Split cb further so both v7x TensorCores get work (>= min_steps steps),
    while keeping each block large enough to amortize per-step overhead."""
    while n_batch * (cpg // cb) < min_steps:
        cands = [
            d for d in range(sub, cb, sub)
            if cpg % d == 0 and d * row_bytes >= min_block_bytes
        ]
        if not cands:
            break
        cb = max(cands)  # strictly decreases cb -> loop terminates
    return cb


def shuffle_block(x, groups: int):
    """channel_shuffle(x, g=groups) with NCHW input, via a Pallas TPU kernel."""
    n, c, h, w = x.shape
    g = int(groups)
    assert c % g == 0, "channels must be divisible by groups"
    cpg = c // g

    # g == 1 (or cpg == 1) is the identity permutation: skip the HBM round trip.
    if g == 1 or cpg == 1:
        return x

    hw = h * w
    itemsize = jnp.dtype(x.dtype).itemsize
    sub = max(8, 32 // max(itemsize, 1))          # sublane alignment: 8 f32 / 16 bf16 / 32 i8
    row_bytes = g * hw * itemsize                  # bytes per sub-channel per step (all groups)

    cb = _pick_channel_block(cpg, row_bytes, sub)
    cb = _ensure_min_steps(cpg, cb, row_bytes, n, sub)
    n_cb = cpg // cb
    grid = (n, n_cb)

    block_bytes = cb * row_bytes
    # Double-buffered input + output blocks, with headroom; capped well inside
    # v7x's 64 MiB physical VMEM (v5e/v6e have 128 MiB).
    vmem_limit = int(min(max(6 * block_bytes, 8 << 20), 32 << 20))
    vmem_limit = int(max(vmem_limit, 4 * block_bytes + (1 << 20)))

    cost = pl.CostEstimate(
        flops=0,
        transcendentals=0,
        bytes_accessed=2 * x.size * itemsize,      # one full read + one full write
    )

    # Input viewed as (n, g, cpg, hw); output viewed as (n, cpg, g*hw).
    # Both host-side reshapes are row-major no-ops.
    x_v = x.reshape(n, g, cpg, hw)
    out = pl.pallas_call(
        functools.partial(_shuffle_kernel, groups=g),
        out_shape=jax.ShapeDtypeStruct((n, cpg, g * hw), x.dtype),
        grid=grid,
        in_specs=[
            pl.BlockSpec((1, g, cb, hw), lambda ni, kb: (ni, 0, kb, 0)),
        ],
        out_specs=pl.BlockSpec((1, cb, g * hw), lambda ni, kb: (ni, kb, 0)),
        compiler_params=pltpu.CompilerParams(
            dimension_semantics=("parallel", "parallel"),
            vmem_limit_bytes=vmem_limit,
        ),
        cost_estimate=cost,
    )(x_v)
    return out.reshape(n, c, h, w)


def channel_shuffle_ref(x, g):
    # Pure-JAX reference mirroring the PyTorch view/permute/view semantics.
    n, c, h, w = x.shape
    return (
        x.reshape(n, g, c // g, h, w)
        .transpose(0, 2, 1, 3, 4)
        .reshape(n, c, h, w)
    )


if __name__ == "__main__":
    key = jax.random.PRNGKey(0)

    # Test 1: small canonical shape (h*w multiple of 128).
    x = jax.random.normal(key, (2, 4, 16, 16), dtype=jnp.float32)
    out = jax.block_until_ready(shuffle_block(x, 2))
    ref = channel_shuffle_ref(x, 2)
    assert out.shape == ref.shape
    assert jnp.array_equal(out, ref), "mismatch (16x16, g=2)"

    # Test 2: 7x7 spatial (h*w = 49, NOT a multiple of 128) — the real
    # ShuffleNet late-stage case that previously hit the slow fallback.
    x2 = jax.random.normal(jax.random.PRNGKey(1), (2, 8, 7, 7), dtype=jnp.float32)
    out2 = jax.block_until_ready(shuffle_block(x2, 2))
    ref2 = channel_shuffle_ref(x2, 2)
    assert jnp.array_equal(out2, ref2), "mismatch (7x7, g=2)"

    # Test 3: groups > 2 with unaligned spatial extent.
    x3 = jax.random.normal(jax.random.PRNGKey(2), (1, 64, 6, 6), dtype=jnp.float32)
    out3 = jax.block_until_ready(shuffle_block(x3, 4))
    ref3 = channel_shuffle_ref(x3, 4)
    assert jnp.array_equal(out3, ref3), "mismatch (6x6, g=4)"

    # Test 4: groups == 1 is the identity (no kernel launch).
    x4 = jax.random.normal(jax.random.PRNGKey(3), (2, 4, 8, 8), dtype=jnp.float32)
    out4 = jax.block_until_ready(shuffle_block(x4, 1))
    assert jnp.array_equal(out4, channel_shuffle_ref(x4, 1)), "mismatch (g=1)"

    print("KERNEL_OK")
</pallas_src>

<mosaic_0001>
module attributes {stable_mosaic.version = 11 : i64} {
  func.func @_shuffle_kernel(%arg0: i32, %arg1: i32, %arg2: memref<1x2x2x256xf32, #tpu.memory_space<vmem>>, %arg3: memref<1x2x512xf32, #tpu.memory_space<vmem>>) attributes {dimension_semantics = [#tpu.dimension_semantics<parallel>, #tpu.dimension_semantics<parallel>], iteration_bounds = array<i64: 2, 1>, scalar_prefetch = 0 : i64, scratch_operands = 0 : i64, tpu.core_type = #tpu.core_type<tc>, window_params = [{transform_indices = @transform_0, window_bounds = array<i64: 1, 2, 2, 256>}, {transform_indices = @transform_1, window_bounds = array<i64: 1, 2, 512>}]} {
    %c0 = arith.constant 0 : index
    %c0_0 = arith.constant 0 : index
    %c0_1 = arith.constant 0 : index
    %c0_2 = arith.constant 0 : index
    %0 = vector.load %arg2[%c0, %c0_0, %c0_1, %c0_2] : memref<1x2x2x256xf32, #tpu.memory_space<vmem>>, vector<1x1x2x256xf32>
    %1 = vector.shape_cast %0 : vector<1x1x2x256xf32> to vector<2x256xf32>
    %c0_3 = arith.constant 0 : index
    %c1 = arith.constant 1 : index
    %c0_4 = arith.constant 0 : index
    %c0_5 = arith.constant 0 : index
    %2 = vector.load %arg2[%c0_3, %c1, %c0_4, %c0_5] : memref<1x2x2x256xf32, #tpu.memory_space<vmem>>, vector<1x1x2x256xf32>
    %3 = vector.shape_cast %2 : vector<1x1x2x256xf32> to vector<2x256xf32>
    %4 = tpu.concatenate %1, %3 in 1 : vector<2x256xf32>, vector<2x256xf32> -> vector<2x512xf32>
    %c0_6 = arith.constant 0 : index
    %c0_7 = arith.constant 0 : index
    %c0_8 = arith.constant 0 : index
    %5 = vector.load %arg3[%c0_6, %c0_7, %c0_8] : memref<1x2x512xf32, #tpu.memory_space<vmem>>, vector<1x2x512xf32>
    %6 = vector.shape_cast %5 : vector<1x2x512xf32> to vector<2x512xf32>
    %7 = vector.shape_cast %4 : vector<2x512xf32> to vector<1x2x512xf32>
    tpu.vector_store %arg3[%c0_6, %c0_7, %c0_8], %7 {strides = array<i32>} : memref<1x2x512xf32, #tpu.memory_space<vmem>>, vector<1x2x512xf32>,
    return
  }
  func.func @transform_0(%arg0: i32, %arg1: i32) -> (i32, i32, i32, i32) {
    %c0_i32 = arith.constant 0 : i32
    %c0_i32_0 = arith.constant 0 : i32
    %c0_i32_1 = arith.constant 0 : i32
    return %arg0, %c0_i32, %arg1, %c0_i32_0 : i32, i32, i32, i32
  }
  func.func @transform_1(%arg0: i32, %arg1: i32) -> (i32, i32, i32) {
    %c0_i32 = arith.constant 0 : i32
    %c0_i32_0 = arith.constant 0 : i32
    return %arg0, %arg1, %c0_i32 : i32, i32, i32
  }
}

</mosaic_0001>

<llo_original>
// kernel: tpu_custom_call.1
$region0: #{tpu_custom_call.1}
  #allocation0 [shape = 'u32[]', space=smem, size = 0x4, offset = 0x4, fixed_abs, tag = 'smem constant byte address 0x4 - core index']
  #allocation1 [shape = 'u32[72,128]{1,0:T(1,128)}', space=vmem, size = 0x9000, scoped, tag = 'internal scratch']
  %s0 = inlined_call_operand.hbm [shape: f32[2,2,2,256], index: 0, kind: input, shape index: {}]
  %s1 = inlined_call_operand.hbm [shape: f32[2,2,512], index: 1, kind: output, shape index: {}]
  %s2 = sld [smem:[#allocation0]]
  $region41: #{tpu_custom_call.1} parent=0
    _
  %s4 = ssub.s32 1, %s2
  %s5 = scalar_select 0, %s4, %s2
  $region1: #{tpu_custom_call.1} parent=0
    #allocation2 [shape = 'u8[8192]{0}', space=vmem, size = 0x2000, scoped, tag = 'input window, operand 0']
    #allocation3 [shape = 's32[2]{0}', space=sflag, size = 0x8, scoped, tag = 'scoped memory for tpu_custom_call.1']
    #allocation4 [shape = 's32[2]{0}', space=sflag, size = 0x8, scoped, tag = 'scoped memory for tpu_custom_call.1']
    #allocation5 [shape = 'u8[8192]{0}', space=vmem, size = 0x2000, scoped, tag = 'output window, operand 0']
    %6 = vsyncpa [#allocation3], 0
    %s7 = scalar_lea.sflag [#allocation3], 1
    %8 = vsyncpa %s7, 0
    %9 = vsyncpa [#allocation4], 0
    %s10 = scalar_lea.sflag [#allocation4], 1
    %11 = vsyncpa %s10, 0
    loop: start=0, step=1, limit=4
    $region2: #{tpu_custom_call.1} parent=1 // loop_pre_header
      _
    $region3: #{tpu_custom_call.1} parent=1 // loop_header
      %s13 = sphi 0, %s17
      %p14 = scmp.ge.s32.totalorder %s13, 4
      %s20 = sphi 0, %s32
      %s21 = sphi 0, %s28
      %s22 = sphi 0, %s20
      %s23 = sphi 0, %s21
      %s24 = sphi 0, %s22
      %s25 = sphi 0, %s23
      %s37 = sphi 0, %s39
      %s40 = sphi 0, %s37
      %s41 = sphi 0, %s40
      %s57 = sphi 0, %s41
      %s65 = sphi 0, %s67
      %s68 = sphi 0, %s65
      %s69 = sphi 0, %s68
      %s85 = sphi 0, %s69
    $region4: #{tpu_custom_call.1} parent=1 // loop_header_branch
      %16 = sbr.rel (%p14) target = $region8
    $region5: #{tpu_custom_call.1} parent=1 // loop_body
      %s18 = ssub.s32 %s13, 1
      %s19 = ssub.s32 %s13, 2
      %s26 = sadd.s32 1, %s21
      %p27 = scmp.ge.s32.totalorder %s26, 1
      %s28 = scalar_select %p27, 0, %s26
      %s29 = sadd.s32 1, %s20
      %s30 = scalar_select %p27, %s29, %s20
      %p31 = scmp.ge.s32.totalorder %s30, 2
      %s32 = scalar_select %p31, 0, %s30
      %s33 = ssub.s32 %s20, %s32
      %s34 = ssub.s32 %s21, %s28
      %s35 = sor.u32 %s33, %s34
      %p36 = scmp.eq.s32.totalorder %s35, 0
      %s38 = sadd.s32 %s37, 1
      %s39 = scalar_select %p36, %s37, %s38
      %p42 = pneg %p36
      %p43 = scmp.eq.s32.totalorder %s13, 1
      %p44 = por %p42, %p43
      %p45 = scmp.ne.s32.totalorder %s37, %s40
      %p46 = scmp.eq.s32.totalorder %s13, 0
      %p47 = por %p45, %p46
      %p48 = scmp.ne.s32.totalorder %s37, %s40
      %p49 = scmp.eq.s32.totalorder %s18, 1
      %p50 = por %p48, %p49
      %p51 = scmp.ne.s32.totalorder %s40, %s41
      %p52 = scmp.eq.s32.totalorder %s18, 0
      %p53 = por %p51, %p52
      %p54 = scmp.ne.s32.totalorder %s40, %s41
      %p55 = scmp.eq.s32.totalorder %s19, 1
      %p56 = por %p54, %p55
      %p58 = scmp.ne.s32.totalorder %s41, %s57
      %p59 = scmp.eq.s32.totalorder %s19, 0
      %p60 = por %p58, %p59
      %s61 = ssub.s32 %s20, %s32
      %s62 = ssub.s32 %s21, %s28
      %s63 = sor.u32 %s61, %s62
      %p64 = scmp.eq.s32.totalorder %s63, 0
      %s66 = sadd.s32 %s65, 1
      %s67 = scalar_select %p64, %s65, %s66
      %p70 = pneg %p64
      %p71 = scmp.eq.s32.totalorder %s13, 1
      %p72 = por %p70, %p71
      %p73 = scmp.ne.s32.totalorder %s65, %s68
      %p74 = scmp.eq.s32.totalorder %s13, 0
      %p75 = por %p73, %p74
      %p76 = scmp.ne.s32.totalorder %s65, %s68
      %p77 = scmp.eq.s32.totalorder %s18, 1
      %p78 = por %p76, %p77
      %p79 = scmp.ne.s32.totalorder %s68, %s69
      %p80 = scmp.eq.s32.totalorder %s18, 0
      %p81 = por %p79, %p80
      %p82 = scmp.ne.s32.totalorder %s68, %s69
      %p83 = scmp.eq.s32.totalorder %s19, 1
      %p84 = por %p82, %p83
      %p86 = scmp.ne.s32.totalorder %s69, %s85
      %p87 = scmp.eq.s32.totalorder %s19, 0
      %p88 = por %p86, %p87
      %p89 = scmp.le.s32.totalorder 1, %s13
      %p90 = scmp.lt.s32.totalorder %s13, 3
      %p91 = pnand %p89, %p90
      %p92 = pneg %p91
      // Predicated region
      $region9: #{tpu_custom_call.1} parent=5 // pred_check
        _
      $region10: #{tpu_custom_call.1} parent=5 // pred_check_branch
        %94 = sbr.rel (%p91) target = $region12
      $region11: #{tpu_custom_call.1} parent=5 // pred_region
        %s95 = ssub.s32 %s13, 1
      $region12: #{tpu_custom_call.1} parent=5 // pred_fallthru
        _
      %p96 = scmp.lt.s32.totalorder %s13, 2
      // Predicated region
      $region13: #{tpu_custom_call.1} parent=5 // pred_check
        %p97 = pneg %p96
      $region14: #{tpu_custom_call.1} parent=5 // pred_check_branch
        %99 = sbr.rel (%p97) target = $region16
      $region15: #{tpu_custom_call.1} parent=5 // pred_region
        // Predicated region
        $region17: #{tpu_custom_call.1} parent=15 // pred_check
          %p100 = pneg %p47
        $region18: #{tpu_custom_call.1} parent=15 // pred_check_branch
          %102 = sbr.rel (%p100) target = $region20
        $region19: #{tpu_custom_call.1} parent=15 // pred_region
          %s103 = sand.u32 %s37, 1
          %s104 = scalar_lea.sflag [#allocation3], %s103
          %s105 = sand.u32 %s37, 1
          %s106 = smul.addr %s105, 8
          %s107 = scalar_lea.vmem [#allocation2], %s106
          %109 = vsyncadd %s104, 0
          %s110 = smul.addr %s21, 2
          %s111 = smul.addr %s20, 4
          %s112 = sadd.s32 %s110, %s111
          %s113 = smul.addr %s112, 2
          %s114 = scalar_lea.hbm %s0, %s113
          %s115 = sshll.u32 %s114, 4
          %s116 = int_to_ptr.hbm [resolvable:$true] %s115
          %s117 = sshll.u32 %s107, 4
          %s118 = int_to_ptr.vmem [resolvable:$true] %s117
          %123 = dma.hbm_to_vmem [thread:$0]  %s116, 128, %s118, %s104, 64, 64, 4
        $region20: #{tpu_custom_call.1} parent=15 // pred_fallthru
          _
      $region16: #{tpu_custom_call.1} parent=5 // pred_fallthru
        _
      %p124 = scmp.le.s32.totalorder 1, %s13
      %p125 = scmp.lt.s32.totalorder %s13, 3
      %p126 = pnand %p124, %p125
      %p127 = pneg %p126
      // Predicated region
      $region21: #{tpu_custom_call.1} parent=5 // pred_check
        _
      $region22: #{tpu_custom_call.1} parent=5 // pred_check_branch
        %129 = sbr.rel (%p126) target = $region24
      $region23: #{tpu_custom_call.1} parent=5 // pred_region
        %s130 = ssub.s32 %s13, 1
        %s131 = sand.u32 %s40, 1
        %s132 = scalar_lea.sflag [#allocation3], %s131
        %s133 = sand.u32 %s40, 1
        %s134 = smul.addr %s133, 8
        %s135 = scalar_lea.vmem [#allocation2], %s134
        // Predicated region
        $region25: #{tpu_custom_call.1} parent=23 // pred_check
          %p136 = pneg %p53
        $region26: #{tpu_custom_call.1} parent=23 // pred_check_branch
          %138 = sbr.rel (%p136) target = $region28
        $region27: #{tpu_custom_call.1} parent=23 // pred_region
          %140 = dma.done %s132, 128
        $region28: #{tpu_custom_call.1} parent=23 // pred_fallthru
          _
        %s141 = sand.u32 %s40, 1
        %s142 = scalar_lea.sflag [#allocation3], %s141
        %s143 = sand.u32 %s40, 1
        %s144 = smul.addr %s143, 8
        %s145 = scalar_lea.vmem [#allocation2], %s144
        %p146 = pneg %p53
        %p147 = pneg %p50
        %p148 = pneg %p81
        %p149 = pneg %p78
        %s150 = sand.u32 %s68, 1
        %s151 = scalar_lea.sflag [#allocation4], %s150
        %s152 = sand.u32 %s68, 1
        %s153 = smul.addr %s152, 8
        %s154 = scalar_lea.vmem [#allocation5], %s153
        %v155 = vld [vmem:[%s135] sm:$0xf]
        %s156 = scalar_lea.vmem %s135, 4 [#allocation2]
        %v157 = vld [vmem:[%s156] sm:$0xf]
        %159 = vst [vmem:[#allocation1] ss:$4 sm:$0xff] %v155
        %v160 = vld.sshfl [vmem:[#allocation1] sm:$0xff pattern:$0x73625140]
        %v161 = vld.sshfl [vmem:[#allocation1 + $0x8] sm:$0xff pattern:$0x73625140]
        %163 = vst [vmem:[#allocation1] ss:$4 sm:$0xff] %v157
        %v164 = vld.sshfl [vmem:[#allocation1] sm:$0xff pattern:$0x73625140]
        %v165 = vld.sshfl [vmem:[#allocation1 + $0x8] sm:$0xff pattern:$0x73625140]
        %v166 = vrot.slane %v161, 6
        %v167 = vrot.slane %v164, 4
        %v168 = vrot.slane %v165, 2
        %vm169 = vcmask 1041408
        %v170 = vsel %vm169, %v160, %v166
        %vm171 = vcmask 1045508
        %v172 = vsel %vm171, %v167, %v168
        %vm173 = vcmask 1043456
        %v174 = vsel %vm173, %v170, %v172
        %176 = vst [vmem:[%s154] sm:$0xff] %v174
        %s177 = sand.u32 %s68, 1
        %s178 = scalar_lea.sflag [#allocation4], %s177
        %s179 = sand.u32 %s68, 1
        %s180 = smul.addr %s179, 8
        %s181 = scalar_lea.vmem [#allocation5], %s180
        // Predicated region
        $region29: #{tpu_custom_call.1} parent=23 // pred_check
          %p182 = pneg %p78
        $region30: #{tpu_custom_call.1} parent=23 // pred_check_branch
          %184 = sbr.rel (%p182) target = $region32
        $region31: #{tpu_custom_call.1} parent=23 // pred_region
          %186 = vsyncadd %s178, 0
          %s187 = smul.addr %s23, 4
          %s188 = smul.addr %s22, 4
          %s189 = sadd.s32 %s187, %s188
          %s190 = smul.addr %s189, 2
          %s191 = scalar_lea.hbm %s1, %s190
          %s193 = sshll.u32 %s181, 4
          %s194 = int_to_ptr.vmem [resolvable:$true] %s193
          %s195 = sshll.u32 %s191, 4
          %s196 = int_to_ptr.hbm [resolvable:$true] %s195
          %198 = dma.vmem_to_hbm [thread:$0]  %s194, 128, %s196, %s178
        $region32: #{tpu_custom_call.1} parent=23 // pred_fallthru
          _
      $region24: #{tpu_custom_call.1} parent=5 // pred_fallthru
        _
      %p199 = scmp.le.s32.totalorder 2, %s13
      // Predicated region
      $region33: #{tpu_custom_call.1} parent=5 // pred_check
        %p200 = pneg %p199
      $region34: #{tpu_custom_call.1} parent=5 // pred_check_branch
        %202 = sbr.rel (%p200) target = $region36
      $region35: #{tpu_custom_call.1} parent=5 // pred_region
        %s203 = ssub.s32 %s13, 2
        // Predicated region
        $region37: #{tpu_custom_call.1} parent=35 // pred_check
          %p204 = pneg %p84
        $region38: #{tpu_custom_call.1} parent=35 // pred_check_branch
          %206 = sbr.rel (%p204) target = $region40
        $region39: #{tpu_custom_call.1} parent=35 // pred_region
          %s207 = sand.u32 %s69, 1
          %s208 = scalar_lea.sflag [#allocation4], %s207
          %s209 = sand.u32 %s69, 1
          %s210 = smul.addr %s209, 8
          %s211 = scalar_lea.vmem [#allocation5], %s210
          %213 = dma.done %s208, 128
        $region40: #{tpu_custom_call.1} parent=35 // pred_fallthru
          _
      $region36: #{tpu_custom_call.1} parent=5 // pred_fallthru
        _
    $region6: #{tpu_custom_call.1} parent=1 // loop_footer
      %s17 = sadd.s32 1, %s13
    $region7: #{tpu_custom_call.1} parent=1 // loop_footer_branch
      %12 = sbr.rel target = $region3
    $region8: #{tpu_custom_call.1} parent=1 // loop_exit
      _
    %214 = vsyncpa [#allocation3], 1
    %s215 = scalar_lea.sflag [#allocation3], 1
    %216 = vsyncpa %s215, 1
    %217 = vsyncpa [#allocation4], 1
    %s218 = scalar_lea.sflag [#allocation4], 1
    %219 = vsyncpa %s218, 1

</llo_original>
